<compile_context>
chip_gen: v6e
topology: v6e:2x2x1
jax: 0.10.0
libtpu: 0.0.40
codegen_flags: <defaults>
</compile_context>

<pallas_src>
import jax
import jax.numpy as jnp
from jax import lax
from jax.experimental import pallas as pl
from jax.experimental.pallas import tpu as pltpu

_TL = 128                      # lane width
_DICE_EPS = 1.0                # smp DiceLoss default eps
_BCE_CLAMP = -100.0            # torch.nn.BCELoss log clamp
_LOGIT_PAD = -1e4              # sigmoid(-1e4) == 0.0 and softplus(-1e4) == 0.0 exactly
_VMEM_LIMIT = 32 * 1024 * 1024


def _round_up(x, m):
    return ((x + m - 1) // m) * m


def _device_kind():
    try:
        return jax.devices()[0].device_kind.lower()
    except Exception:
        return ""


def _default_block_rows(kind):
    # v5e (~0.82 TB/s, 16 MiB scoped-VMEM default): 4096 rows (2 MiB/block).
    # v6e/v7x (1.4-3.2 TB/s): 8192 rows (4 MiB/block) to bury per-step overhead.
    if "v5 lite" in kind or "v5e" in kind or "v5lite" in kind:
        return 4096
    return 8192


def _default_num_splits(kind):
    # Two contiguous half-streams only where there are two TensorCores (v7x);
    # on single-TC parts a split is a pure sequential outer loop, so keep 1.
    return 2 if ("v7" in kind or "7x" in kind) else 1


def _pick_sub_rows(block_rows, target):
    """Largest multiple of 8 that divides block_rows and is <= target."""
    target = max(8, (min(target, block_rows) // 8) * 8)
    for d in range(target, 7, -8):
        if block_rows % d == 0:
            return d
    return block_rows


def _make_kernel(*, br, sub, steps, num_splits, rows, from_logits, binary_targets):
    blocks_total = num_splits * steps
    edge_valid = rows - (blocks_total - 1) * br     # valid rows in the globally-last block
    full_nsub = br // sub
    edge_nsub = -(-edge_valid // sub)
    all_full = (edge_valid == br)

    def elemwise(x, gt):
        """Per-element (pr, bce) in f32. NOTE: clamp-before-multiply ordering is
        load-bearing — masked/padded rows carry pr=0 (or x=-1e4), gt=0 and must
        contribute exactly 0 (no 0*(-inf) NaNs)."""
        if from_logits:
            pr = jax.nn.sigmoid(x)
            # BCE-with-logits: softplus(x) - gt*x (stable; exact for hard & soft gt).
            bce = jnp.maximum(x, 0.0) - gt * x + jnp.log1p(jnp.exp(-jnp.abs(x)))
        elif binary_targets:
            # One log/element instead of log + log1p (EUP is the v7x flip risk).
            p_t = jnp.where(gt != 0.0, x, 1.0 - x)
            bce = -jnp.maximum(jnp.log(p_t), _BCE_CLAMP)
            pr = x
        else:
            # Soft-target form: matches torch.nn.BCELoss for any gt in [0,1].
            log_p = jnp.maximum(jnp.log(x), _BCE_CLAMP)
            log_q = jnp.maximum(jnp.log1p(-x), _BCE_CLAMP)
            bce = -(log_q + gt * (log_p - log_q))
            pr = x
        return pr, bce

    def accumulate(x_ref, gt_ref, out_ref, r0, masked):
        x = x_ref[pl.ds(r0, sub), :].astype(jnp.float32)
        gt = gt_ref[pl.ds(r0, sub), :].astype(jnp.float32)
        if masked:
            # Rows past edge_valid hold unspecified DMA padding; replace them
            # with neutral values BEFORE any transcendental (where = NaN-proof).
            row = r0 + lax.broadcasted_iota(jnp.int32, (sub, 1), 0)
            valid = row < edge_valid
            neutral = jnp.float32(_LOGIT_PAD if from_logits else 0.0)
            x = jnp.where(valid, x, neutral)
            gt = jnp.where(valid, gt, 0.0)
        pr, bce = elemwise(x, gt)
        g = sub // 8
        pr3 = pr.reshape(g, 8, _TL)            # layout-preserving sublane split
        gt3 = gt.reshape(g, 8, _TL)
        bce3 = bce.reshape(g, 8, _TL)
        # Reduce only over the vreg-count axis: pure VPU adds, no per-step XLU.
        out_ref[0, 0] += jnp.sum(gt3 * pr3, axis=0)   # tp
        out_ref[0, 1] += jnp.sum(pr3, axis=0)         # sum(pr)
        out_ref[0, 2] += jnp.sum(gt3, axis=0)         # sum(gt)
        out_ref[0, 3] += jnp.sum(bce3, axis=0)        # bce numerator

    def kernel(x_ref, gt_ref, out_ref):
        split = pl.program_id(0)
        step = pl.program_id(1)

        @pl.when(step == 0)
        def _init():
            out_ref[...] = jnp.zeros_like(out_ref)    # out block is VMEM-resident
                                                      # across the step axis

        def run(nsub, masked):
            if nsub <= 2:                              # static unroll for tiny blocks
                for c in range(nsub):
                    accumulate(x_ref, gt_ref, out_ref, c * sub, masked)
            else:
                def body(c, carry):
                    r0 = pl.multiple_of(c * sub, sub)
                    accumulate(x_ref, gt_ref, out_ref, r0, masked)
                    return carry
                lax.fori_loop(0, nsub, body, 0)

        if all_full:
            run(full_nsub, False)                      # no masking anywhere
        else:
            # Blocks are assigned contiguously, so the only partial block is
            # the last step of the last split.
            is_edge = jnp.logical_and(split == num_splits - 1, step == steps - 1)

            @pl.when(jnp.logical_not(is_edge))
            def _interior():
                run(full_nsub, False)

            @pl.when(is_edge)
            def _edge():
                run(edge_nsub, True)

    return kernel


def semseg_loss(pr, gt, dice=0.5, bce=0.5, *, from_logits=False,
                binary_targets=True, block_rows=None, num_splits=None,
                sub_rows=512):
    """loss = dice * DiceLoss(pr, gt) + bce * BCELoss(pr, gt).

    pr: predictions in (0,1) (raw logits if from_logits=True); any shape.
    gt: same shape as pr. Pass gt as int8/uint8/bf16 to cut HBM bytes on this
        bandwidth-bound kernel (upcast happens in-kernel only). pr may be bf16
        if ~1e-3 relative BCE error is acceptable.
    binary_targets=True uses the one-log BCE form (valid only for gt in {0,1});
        pass False for soft targets (matches torch.nn.BCELoss exactly).
    from_logits=True fuses the sigmoid into the kernel (removes the standalone
        sigmoid's extra HBM pass); BCE uses the stable logits form, identical
        wherever the -100 clamp would not have fired.
    """
    assert pr.shape == gt.shape, (pr.shape, gt.shape)
    n = int(pr.size)
    assert n > 0

    x_flat = pr.reshape(-1)          # contiguous reshape: no HBM copy
    gt_flat = gt.reshape(-1)

    rows = -(-n // _TL)
    if n % _TL == 0 and rows % 8 == 0:
        pass                          # zero-copy path (any n that is a multiple of 1024)
    else:
        # TODO(synk): rare ragged sizes still take one pad copy; everything
        # else streams straight from the caller's buffers.
        rows = _round_up(rows, 32)
        pad_n = rows * _TL - n
        x_flat = jnp.pad(x_flat, (0, pad_n),
                         constant_values=(_LOGIT_PAD if from_logits else 0))
        gt_flat = jnp.pad(gt_flat, (0, pad_n))
        # Padded elements (pr=0 / x=-1e4, gt=0) contribute exactly 0 to all sums.

    kind = _device_kind()
    if block_rows is None:
        block_rows = _default_block_rows(kind)
    if num_splits is None:
        num_splits = _default_num_splits(kind)
    num_splits = max(1, int(num_splits))

    brr = max(32, _round_up(int(block_rows), 32))
    br = rows if rows <= brr else brr           # full-dim block for small inputs
    sub = _pick_sub_rows(br, int(sub_rows))
    blocks_total = -(-rows // br)
    if blocks_total % num_splits:
        # Keep every grid block real (no out-of-range block indices); the
        # masked edge block then always lives in the last split's last step.
        num_splits = 1
    steps = blocks_total // num_splits

    x2 = x_flat.reshape(rows, _TL)
    gt2 = gt_flat.reshape(rows, _TL)

    kernel = _make_kernel(br=br, sub=sub, steps=steps, num_splits=num_splits,
                          rows=rows, from_logits=from_logits,
                          binary_targets=binary_targets)

    partials = pl.pallas_call(
        kernel,
        out_shape=jax.ShapeDtypeStruct((num_splits, 4, 8, _TL), jnp.float32),
        grid_spec=pltpu.PrefetchScalarGridSpec(
            num_scalar_prefetch=0,
            grid=(num_splits, steps),
            in_specs=[
                pl.BlockSpec((br, _TL), lambda s, i: (s * steps + i, 0)),
                pl.BlockSpec((br, _TL), lambda s, i: (s * steps + i, 0)),
            ],
            out_specs=pl.BlockSpec((1, 4, 8, _TL), lambda s, i: (s, 0, 0, 0)),
        ),
        compiler_params=pltpu.CompilerParams(
            # TODO(synk): on v7x, confirm in a trace that the size-2 'parallel'
            # axis really shards across both TensorCores; if not, switch to
            # pltpu.CORE_PARALLEL / an explicit core_map split of the row range.
            dimension_semantics=("parallel", "arbitrary"),
            vmem_limit_bytes=_VMEM_LIMIT,
        ),
    )(x2, gt2)

    # Tiny final cross-lane reduce + scalar combine on (num_splits, 4, 8, 128).
    sums = jnp.sum(partials, axis=(0, 2, 3))            # (4,)
    tp, sp, sg, bce_sum = sums[0], sums[1], sums[2], sums[3]
    dice_loss = 1.0 - (2.0 * tp + _DICE_EPS) / (sp + sg + _DICE_EPS)
    bce_loss = bce_sum * jnp.float32(1.0 / n)            # 1/n in double at trace time
    return jnp.float32(dice) * dice_loss + jnp.float32(bce) * bce_loss


def _reference_loss(pr, gt, dice=0.5, bce=0.5):
    pr = pr.astype(jnp.float32)
    gt = gt.astype(jnp.float32)
    tp = jnp.sum(gt * pr)
    sp = jnp.sum(pr)
    sg = jnp.sum(gt)
    dice_loss = 1.0 - (2.0 * tp + _DICE_EPS) / (sp + sg + _DICE_EPS)
    log_p = jnp.maximum(jnp.log(pr), _BCE_CLAMP)
    log_q = jnp.maximum(jnp.log1p(-pr), _BCE_CLAMP)
    bce_loss = jnp.mean(-(gt * log_p + (1.0 - gt) * log_q))
    return dice * dice_loss + bce * bce_loss


if __name__ == "__main__":
    key = jax.random.PRNGKey(0)
    ks = jax.random.split(key, 8)

    def check(out, ref, name):
        assert jnp.allclose(out, ref, rtol=2e-4, atol=1e-5), (name, out, ref)

    # T1: NCHW batch, n % 1024 == 0 (zero-copy path); gt streamed as int8.
    shape1 = (2, 4, 16, 16)
    pr1 = jax.nn.sigmoid(jax.random.normal(ks[0], shape1, dtype=jnp.float32))
    gt1 = jax.random.uniform(ks[1], shape1) > 0.5
    out1 = jax.block_until_ready(semseg_loss(pr1, gt1.astype(jnp.int8)))
    check(out1, _reference_loss(pr1, gt1.astype(jnp.float32)), "t1")

    # T2: ragged size + exact soft-target (two-log) BCE formula (pad path).
    shape2 = (1, 3, 15, 17)
    pr2 = jax.nn.sigmoid(jax.random.normal(ks[2], shape2, dtype=jnp.float32))
    gt2 = (jax.random.uniform(ks[3], shape2) > 0.5).astype(jnp.float32)
    out2 = jax.block_until_ready(semseg_loss(pr2, gt2, binary_targets=False))
    check(out2, _reference_loss(pr2, gt2), "t2")

    # T3: multi-block grid with a partial (masked) edge block; gt as bf16.
    shape3 = (1, 1, 40, 128)
    pr3 = jax.nn.sigmoid(jax.random.normal(ks[4], shape3, dtype=jnp.float32))
    gt3 = jax.random.uniform(ks[5], shape3) > 0.5
    out3 = jax.block_until_ready(
        semseg_loss(pr3, gt3.astype(jnp.bfloat16), block_rows=32))
    check(out3, _reference_loss(pr3, gt3.astype(jnp.float32)), "t3")

    # T4: fused-sigmoid (logits) path, explicit 2-way split grid, int8 gt.
    shape4 = (2, 2, 64, 128)
    logits4 = jax.random.normal(ks[6], shape4, dtype=jnp.float32)
    gt4 = jax.random.uniform(ks[7], shape4) > 0.5
    out4 = jax.block_until_ready(
        semseg_loss(logits4, gt4.astype(jnp.int8), from_logits=True,
                    block_rows=64, num_splits=2))
    check(out4, _reference_loss(jax.nn.sigmoid(logits4),
                                gt4.astype(jnp.float32)), "t4")

    # T5: ragged + logits (exercises the exact-zero -1e4 logit padding).
    shape5 = (1, 1, 5, 30)
    logits5 = jax.random.normal(jax.random.PRNGKey(1), shape5, dtype=jnp.float32)
    gt5 = jax.random.uniform(jax.random.PRNGKey(2), shape5) > 0.5
    out5 = jax.block_until_ready(
        semseg_loss(logits5, gt5.astype(jnp.int8), from_logits=True))
    check(out5, _reference_loss(jax.nn.sigmoid(logits5),
                                gt5.astype(jnp.float32)), "t5")

    print("KERNEL_OK")
</pallas_src>

<mosaic_0001>
module attributes {stable_mosaic.version = 11 : i64} {
  func.func @kernel(%arg0: i32, %arg1: i32, %arg2: memref<16x128xf32, #tpu.memory_space<vmem>>, %arg3: memref<16x128xi8, #tpu.memory_space<vmem>>, %arg4: memref<1x4x8x128xf32, #tpu.memory_space<vmem>>) attributes {dimension_semantics = [#tpu.dimension_semantics<parallel>, #tpu.dimension_semantics<arbitrary>], iteration_bounds = array<i64: 1, 1>, scalar_prefetch = 0 : i64, scratch_operands = 0 : i64, tpu.core_type = #tpu.core_type<tc>, window_params = [{transform_indices = @transform_0, window_bounds = array<i64: 16, 128>}, {transform_indices = @transform_1, window_bounds = array<i64: 16, 128>}, {transform_indices = @transform_2, window_bounds = array<i64: 1, 4, 8, 128>}]} {
    %c0_i32 = arith.constant 0 : i32
    %0 = arith.cmpi eq, %arg1, %c0_i32 : i32
    %1 = arith.extui %0 : i1 to i32
    %c0_i32_0 = arith.constant 0 : i32
    %2 = arith.cmpi ne, %1, %c0_i32_0 : i32
    scf.if %2 {
      %cst_40 = arith.constant 0.000000e+00 : f32
      %48 = vector.broadcast %cst_40 : f32 to vector<1x4x8x128xf32>
      %c0_41 = arith.constant 0 : index
      %c0_42 = arith.constant 0 : index
      %c0_43 = arith.constant 0 : index
      %c0_44 = arith.constant 0 : index
      %49 = vector.load %arg4[%c0_41, %c0_42, %c0_43, %c0_44] : memref<1x4x8x128xf32, #tpu.memory_space<vmem>>, vector<1x4x8x128xf32>
      tpu.vector_store %arg4[%c0_41, %c0_42, %c0_43, %c0_44], %48 {strides = array<i32>} : memref<1x4x8x128xf32, #tpu.memory_space<vmem>>, vector<1x4x8x128xf32>,
    } else {
    }
    %c0 = arith.constant 0 : index
    %c0_1 = arith.constant 0 : index
    %3 = vector.load %arg2[%c0, %c0_1] : memref<16x128xf32, #tpu.memory_space<vmem>>, vector<16x128xf32>
    %c0_2 = arith.constant 0 : index
    %c0_3 = arith.constant 0 : index
    %4 = vector.load %arg3[%c0_2, %c0_3] : memref<16x128xi8, #tpu.memory_space<vmem>>, vector<16x128xi8>
    %5 = arith.sitofp %4 : vector<16x128xi8> to vector<16x128xf32>
    %cst = arith.constant 0.000000e+00 : f32
    %6 = vector.broadcast %cst : f32 to vector<16x128xf32>
    %7 = arith.cmpf one, %5, %6 : vector<16x128xf32>
    %cst_4 = arith.constant 1.000000e+00 : f32
    %8 = vector.broadcast %cst_4 : f32 to vector<16x128xf32>
    %9 = arith.subf %8, %3 : vector<16x128xf32>
    %10 = arith.select %7, %3, %9 : vector<16x128xi1>, vector<16x128xf32>
    %11 = math.log %10 : vector<16x128xf32>
    %cst_5 = arith.constant -1.000000e+02 : f32
    %12 = vector.broadcast %cst_5 : f32 to vector<16x128xf32>
    %13 = arith.maximumf %11, %12 : vector<16x128xf32>
    %cst_6 = arith.constant 0.000000e+00 : f32
    %14 = vector.broadcast %cst_6 : f32 to vector<16x128xf32>
    %15 = arith.subf %14, %13 : vector<16x128xf32>
    %16 = vector.shape_cast %3 : vector<16x128xf32> to vector<2x8x128xf32>
    %17 = vector.shape_cast %5 : vector<16x128xf32> to vector<2x8x128xf32>
    %18 = vector.shape_cast %15 : vector<16x128xf32> to vector<2x8x128xf32>
    %c0_7 = arith.constant 0 : index
    %c0_8 = arith.constant 0 : index
    %c0_9 = arith.constant 0 : index
    %c0_10 = arith.constant 0 : index
    %19 = vector.load %arg4[%c0_7, %c0_8, %c0_9, %c0_10] : memref<1x4x8x128xf32, #tpu.memory_space<vmem>>, vector<1x1x8x128xf32>
    %20 = vector.shape_cast %19 : vector<1x1x8x128xf32> to vector<8x128xf32>
    %21 = arith.mulf %17, %16 : vector<2x8x128xf32>
    %cst_11 = arith.constant dense<0.000000e+00> : vector<8x128xf32>
    %22 = vector.multi_reduction <add>, %21, %cst_11 [0] : vector<2x8x128xf32> to vector<8x128xf32>
    %23 = arith.addf %20, %22 : vector<8x128xf32>
    %c0_12 = arith.constant 0 : index
    %c0_13 = arith.constant 0 : index
    %c0_14 = arith.constant 0 : index
    %c0_15 = arith.constant 0 : index
    %24 = vector.load %arg4[%c0_12, %c0_13, %c0_14, %c0_15] : memref<1x4x8x128xf32, #tpu.memory_space<vmem>>, vector<1x1x8x128xf32>
    %25 = vector.shape_cast %24 : vector<1x1x8x128xf32> to vector<8x128xf32>
    %26 = vector.shape_cast %23 : vector<8x128xf32> to vector<1x1x8x128xf32>
    tpu.vector_store %arg4[%c0_12, %c0_13, %c0_14, %c0_15], %26 {strides = array<i32>} : memref<1x4x8x128xf32, #tpu.memory_space<vmem>>, vector<1x1x8x128xf32>,
    %c0_16 = arith.constant 0 : index
    %c1 = arith.constant 1 : index
    %c0_17 = arith.constant 0 : index
    %c0_18 = arith.constant 0 : index
    %27 = vector.load %arg4[%c0_16, %c1, %c0_17, %c0_18] : memref<1x4x8x128xf32, #tpu.memory_space<vmem>>, vector<1x1x8x128xf32>
    %28 = vector.shape_cast %27 : vector<1x1x8x128xf32> to vector<8x128xf32>
    %cst_19 = arith.constant dense<0.000000e+00> : vector<8x128xf32>
    %29 = vector.multi_reduction <add>, %16, %cst_19 [0] : vector<2x8x128xf32> to vector<8x128xf32>
    %30 = arith.addf %28, %29 : vector<8x128xf32>
    %c0_20 = arith.constant 0 : index
    %c1_21 = arith.constant 1 : index
    %c0_22 = arith.constant 0 : index
    %c0_23 = arith.constant 0 : index
    %31 = vector.load %arg4[%c0_20, %c1_21, %c0_22, %c0_23] : memref<1x4x8x128xf32, #tpu.memory_space<vmem>>, vector<1x1x8x128xf32>
    %32 = vector.shape_cast %31 : vector<1x1x8x128xf32> to vector<8x128xf32>
    %33 = vector.shape_cast %30 : vector<8x128xf32> to vector<1x1x8x128xf32>
    tpu.vector_store %arg4[%c0_20, %c1_21, %c0_22, %c0_23], %33 {strides = array<i32>} : memref<1x4x8x128xf32, #tpu.memory_space<vmem>>, vector<1x1x8x128xf32>,
    %c0_24 = arith.constant 0 : index
    %c2 = arith.constant 2 : index
    %c0_25 = arith.constant 0 : index
    %c0_26 = arith.constant 0 : index
    %34 = vector.load %arg4[%c0_24, %c2, %c0_25, %c0_26] : memref<1x4x8x128xf32, #tpu.memory_space<vmem>>, vector<1x1x8x128xf32>
    %35 = vector.shape_cast %34 : vector<1x1x8x128xf32> to vector<8x128xf32>
    %cst_27 = arith.constant dense<0.000000e+00> : vector<8x128xf32>
    %36 = vector.multi_reduction <add>, %17, %cst_27 [0] : vector<2x8x128xf32> to vector<8x128xf32>
    %37 = arith.addf %35, %36 : vector<8x128xf32>
    %c0_28 = arith.constant 0 : index
    %c2_29 = arith.constant 2 : index
    %c0_30 = arith.constant 0 : index
    %c0_31 = arith.constant 0 : index
    %38 = vector.load %arg4[%c0_28, %c2_29, %c0_30, %c0_31] : memref<1x4x8x128xf32, #tpu.memory_space<vmem>>, vector<1x1x8x128xf32>
    %39 = vector.shape_cast %38 : vector<1x1x8x128xf32> to vector<8x128xf32>
    %40 = vector.shape_cast %37 : vector<8x128xf32> to vector<1x1x8x128xf32>
    tpu.vector_store %arg4[%c0_28, %c2_29, %c0_30, %c0_31], %40 {strides = array<i32>} : memref<1x4x8x128xf32, #tpu.memory_space<vmem>>, vector<1x1x8x128xf32>,
    %c0_32 = arith.constant 0 : index
    %c3 = arith.constant 3 : index
    %c0_33 = arith.constant 0 : index
    %c0_34 = arith.constant 0 : index
    %41 = vector.load %arg4[%c0_32, %c3, %c0_33, %c0_34] : memref<1x4x8x128xf32, #tpu.memory_space<vmem>>, vector<1x1x8x128xf32>
    %42 = vector.shape_cast %41 : vector<1x1x8x128xf32> to vector<8x128xf32>
    %cst_35 = arith.constant dense<0.000000e+00> : vector<8x128xf32>
    %43 = vector.multi_reduction <add>, %18, %cst_35 [0] : vector<2x8x128xf32> to vector<8x128xf32>
    %44 = arith.addf %42, %43 : vector<8x128xf32>
    %c0_36 = arith.constant 0 : index
    %c3_37 = arith.constant 3 : index
    %c0_38 = arith.constant 0 : index
    %c0_39 = arith.constant 0 : index
    %45 = vector.load %arg4[%c0_36, %c3_37, %c0_38, %c0_39] : memref<1x4x8x128xf32, #tpu.memory_space<vmem>>, vector<1x1x8x128xf32>
    %46 = vector.shape_cast %45 : vector<1x1x8x128xf32> to vector<8x128xf32>
    %47 = vector.shape_cast %44 : vector<8x128xf32> to vector<1x1x8x128xf32>
    tpu.vector_store %arg4[%c0_36, %c3_37, %c0_38, %c0_39], %47 {strides = array<i32>} : memref<1x4x8x128xf32, #tpu.memory_space<vmem>>, vector<1x1x8x128xf32>,
    return
  }
  func.func @transform_0(%arg0: i32, %arg1: i32) -> (i32, i32) {
    %c1_i32 = arith.constant 1 : i32
    %0 = arith.muli %arg0, %c1_i32 : i32
    %1 = arith.addi %0, %arg1 : i32
    %c0_i32 = arith.constant 0 : i32
    %c0_i32_0 = arith.constant 0 : i32
    return %1, %c0_i32 : i32, i32
  }
  func.func @transform_1(%arg0: i32, %arg1: i32) -> (i32, i32) {
    %c1_i32 = arith.constant 1 : i32
    %0 = arith.muli %arg0, %c1_i32 : i32
    %1 = arith.addi %0, %arg1 : i32
    %c0_i32 = arith.constant 0 : i32
    %c0_i32_0 = arith.constant 0 : i32
    return %1, %c0_i32 : i32, i32
  }
  func.func @transform_2(%arg0: i32, %arg1: i32) -> (i32, i32, i32, i32) {
    %c0_i32 = arith.constant 0 : i32
    %c0_i32_0 = arith.constant 0 : i32
    %c0_i32_1 = arith.constant 0 : i32
    %c0_i32_2 = arith.constant 0 : i32
    return %arg0, %c0_i32, %c0_i32_0, %c0_i32_1 : i32, i32, i32, i32
  }
}

</mosaic_0001>

<llo_original>
// kernel: tpu_custom_call.1
$region0: #{tpu_custom_call.1}
  #allocation0 [shape = 'u32[]', space=smem, size = 0x4, offset = 0x4, fixed_abs, tag = 'smem constant byte address 0x4 - core index']
  #allocation1 [shape = 'u32[144,128]{1,0:T(1,128)}', space=vmem, size = 0x12000, scoped, tag = 'internal scratch']
  %s0 = inlined_call_operand.hbm [shape: f32[16,128], index: 0, kind: input, shape index: {}]
  %s1 = inlined_call_operand.hbm [shape: s8[16,128], index: 1, kind: input, shape index: {}]
  %s2 = inlined_call_operand.hbm [shape: f32[1,4,8,128], index: 2, kind: output, shape index: {}]
  %s3 = sld [smem:[#allocation0]]
  $region30: #{tpu_custom_call.1} parent=0
    _
  %s5 = ssub.s32 1, %s3
  %s6 = scalar_select 0, %s5, %s3
  $region1: #{tpu_custom_call.1} parent=0
    #allocation2 [shape = 'u8[8192]{0}', space=vmem, size = 0x2000, scoped, tag = 'input window, operand 0, single buffered']
    #allocation3 [shape = 's32[1]{0}', space=sflag, size = 0x4, scoped, tag = 'scoped memory for tpu_custom_call.1']
    #allocation4 [shape = 's32[1]{0}', space=sflag, size = 0x4, scoped, tag = 'scoped memory for tpu_custom_call.1']
    #allocation5 [shape = 'u8[2048]{0}', space=vmem, size = 0x800, scoped, tag = 'input window, operand 1, single buffered']
    #allocation6 [shape = 's32[1]{0}', space=sflag, size = 0x4, scoped, tag = 'scoped memory for tpu_custom_call.1']
    #allocation7 [shape = 'u8[16384]{0}', space=vmem, size = 0x4000, scoped, tag = 'output window, operand 0, single buffered']
    %7 = vsyncpa [#allocation3], 0
    %8 = vsyncpa [#allocation6], 0
    %9 = vsyncpa [#allocation4], 0
    // Predicated region
    $region2: #{tpu_custom_call.1} parent=1 // pred_check
      _
    $region3: #{tpu_custom_call.1} parent=1 // pred_check_branch
      %11 = sbr.rel (0) target = $region5
    $region4: #{tpu_custom_call.1} parent=1 // pred_region
      %s12 = sadd.s32 0, 0
      %s13 = smul.u32 2, %s12
      %s15 = ssub.s32 256, 256
      %16 = vsyncadd [#allocation3], %s15
      %s17 = smul.addr %s13, 128
      %s18 = scalar_lea.hbm %s0, %s17
      %s19 = sshll.u32 [#allocation2], 4
      %s20 = int_to_ptr.vmem [resolvable:$true] %s19
      %25 = dma.hbm_to_vmem [thread:$0]  %s18, 256, %s20, [#allocation3], 128, 128, 8
    $region5: #{tpu_custom_call.1} parent=1 // pred_fallthru
      _
    // Predicated region
    $region6: #{tpu_custom_call.1} parent=1 // pred_check
      _
    $region7: #{tpu_custom_call.1} parent=1 // pred_check_branch
      %27 = sbr.rel (0) target = $region9
    $region8: #{tpu_custom_call.1} parent=1 // pred_region
      %s28 = sadd.s32 0, 0
      %s29 = smul.u32 2, %s28
      %s31 = ssub.s32 64, 64
      %32 = vsyncadd [#allocation6], %s31
      %s33 = smul.addr %s29, 32
      %s34 = scalar_lea.hbm %s1, %s33
      %s35 = sshll.u32 [#allocation5], 4
      %s36 = int_to_ptr.vmem [resolvable:$true] %s35
      %41 = dma.hbm_to_vmem [thread:$0]  %s34, 64, %s36, [#allocation6], 32, 32, 2
    $region9: #{tpu_custom_call.1} parent=1 // pred_fallthru
      _
    // Predicated region
    $region10: #{tpu_custom_call.1} parent=1 // pred_check
      _
    $region11: #{tpu_custom_call.1} parent=1 // pred_check_branch
      %43 = sbr.rel (0) target = $region13
    $region12: #{tpu_custom_call.1} parent=1 // pred_region
      %44 = dma.done [#allocation3], 256
    $region13: #{tpu_custom_call.1} parent=1 // pred_fallthru
      _
    // Predicated region
    $region14: #{tpu_custom_call.1} parent=1 // pred_check
      _
    $region15: #{tpu_custom_call.1} parent=1 // pred_check_branch
      %46 = sbr.rel (0) target = $region17
    $region16: #{tpu_custom_call.1} parent=1 // pred_region
      %47 = dma.done [#allocation6], 64
    $region17: #{tpu_custom_call.1} parent=1 // pred_fallthru
      _
    %s48 = sadd.s32 0, 0
    %s49 = smul.u32 2, %s48
    %s50 = sadd.s32 0, 0
    %s51 = smul.u32 2, %s50
    %p52 = scmp.eq.s32.totalorder 0, 0
    // Predicated region
    $region18: #{tpu_custom_call.1} parent=1 // pred_check
      %p53 = pneg %p52
    $region19: #{tpu_custom_call.1} parent=1 // pred_check_branch
      %55 = sbr.rel (%p53) target = $region21
    $region20: #{tpu_custom_call.1} parent=1 // pred_region
      %56 = vst [vmem:[#allocation7] sm:$0xff] 0.0
      %57 = vst [vmem:[#allocation7 + $0x8] sm:$0xff] 0.0
      %58 = vst [vmem:[#allocation7 + $0x10] sm:$0xff] 0.0
      %59 = vst [vmem:[#allocation7 + $0x18] sm:$0xff] 0.0
    $region21: #{tpu_custom_call.1} parent=1 // pred_fallthru
      _
    %v60 = vld [vmem:[#allocation2] sm:$0xff]
    %v61 = vld [vmem:[#allocation2 + $0x8] sm:$0xff]
    %v62 = vld [vmem:[#allocation5] sm:$0x3]
    %v63 = vld [vmem:[#allocation5 + $0x2] sm:$0x3]
    %v64 = vunpack.c.0.s8 %v62
    %v65 = vunpack.c.0.s8 %v63
    %v66 = vcvt.s32.f32 %v64
    %v67 = vcvt.s32.f32 %v65
    %vm68 = vcmp.ne.f32.partialorder %v66, 0.0
    %vm69 = vcmp.ne.f32.partialorder %v67, 0.0
    %v70 = vsub.f32 1.0, %v60
    %v71 = vsub.f32 1.0, %v61
    %v72 = vsel %vm68, %v60, %v70
    %v73 = vsel %vm69, %v61, %v71
    %v74 = vlog2.pop %v72
    %v75 = vmul.f32 %v74, 0.6931472
    %v76 = vlog2.pop %v73
    %v77 = vmul.f32 %v76, 0.6931472
    %v78 = vmax.f32 %v75, -100.0
    %v79 = vmax.f32 %v77, -100.0
    %v80 = vsub.f32 0.0, %v78
    %v81 = vsub.f32 0.0, %v79
    %v82 = vld [vmem:[#allocation7] sm:$0xff]
    %v83 = vmul.f32 %v66, %v60
    %v84 = vmul.f32 %v67, %v61
    %v85 = vadd.f32 %v83, %v84
    %v86 = vadd.f32 %v82, %v85
    %87 = vst [vmem:[#allocation7] sm:$0xff] %v86
    %s88 = scalar_lea.vmem [#allocation7], 8
    %v89 = vld [vmem:[%s88] sm:$0xff]
    %v90 = vadd.f32 %v60, %v61
    %v91 = vadd.f32 %v89, %v90
    %92 = vst [vmem:[%s88] sm:$0xff] %v91
    %s93 = scalar_lea.vmem [#allocation7], 16
    %v94 = vld [vmem:[%s93] sm:$0xff]
    %v95 = vadd.f32 %v66, %v67
    %v96 = vadd.f32 %v94, %v95
    %97 = vst [vmem:[%s93] sm:$0xff] %v96
    %s98 = scalar_lea.vmem [#allocation7], 24
    %v99 = vld [vmem:[%s98] sm:$0xff]
    %v100 = vadd.f32 %v80, %v81
    %v101 = vadd.f32 %v99, %v100
    %102 = vst [vmem:[%s98] sm:$0xff] %v101
    // Predicated region
    $region22: #{tpu_custom_call.1} parent=1 // pred_check
      _
    $region23: #{tpu_custom_call.1} parent=1 // pred_check_branch
      %104 = sbr.rel (0) target = $region25
    $region24: #{tpu_custom_call.1} parent=1 // pred_region
      %s106 = ssub.s32 512, 512
      %107 = vsyncadd [#allocation4], %s106
      %s108 = sshll.u32 [#allocation7], 4
      %s109 = int_to_ptr.vmem [resolvable:$true] %s108
      %114 = dma.vmem_to_hbm [thread:$0]  %s109, 512, %s2, [#allocation4], 128, 128, 8
    $region25: #{tpu_custom_call.1} parent=1 // pred_fallthru
      _
    // Predicated region
    $region26: #{tpu_custom_call.1} parent=1 // pred_check
      _
    $region27: #{tpu_custom_call.1} parent=1 // pred_check_branch
      %116 = sbr.rel (0) target = $region29
    $region28: #{tpu_custom_call.1} parent=1 // pred_region
      %117 = dma.done [#allocation4], 512
    $region29: #{tpu_custom_call.1} parent=1 // pred_fallthru
      _
    %118 = vsyncpa [#allocation3], 1
    %119 = vsyncpa [#allocation6], 1
    %120 = vsyncpa [#allocation4], 1

</llo_original>
